<compile_context>
chip_gen: v7x
topology: tpu7x:2x2x1
jax: 0.10.0
libtpu: 0.0.40
codegen_flags: <defaults>
</compile_context>

<pallas_src>
import jax
import jax.numpy as jnp
from jax.experimental import pallas as pl
from jax.experimental.pallas import tpu as pltpu


# ----------------------------------------------------------------------------
# Fused kernel
# ----------------------------------------------------------------------------
def _fused_kernel(img_ref, num_ref, wv_ref, wm_ref,
                  gv_ref, gm_ref, bv_ref, bm_ref,
                  wov_ref, wom_ref, bo_ref,
                  o_ref, acc_ref):
    """One (row-tile, k-tile) grid step of the fused CombinedModel forward."""
    k = pl.program_id(1)
    nk = pl.num_programs(1)

    # --- streaming image projection: acc += img_tile @ w_vit_tile (MXU, f32 acc) ---
    @pl.when(k == 0)
    def _init():
        acc_ref[...] = jnp.zeros_like(acc_ref)

    acc_ref[...] += jnp.dot(img_ref[...], wv_ref[...],
                            preferred_element_type=jnp.float32)

    # --- finalize: mlp projection + LayerNorm + ReLU + output Linear, all in VMEM ---
    @pl.when(k == nk - 1)
    def _finalize():
        vit = acc_ref[...]                                           # (tm, vit_dim) f32
        mlp = jnp.dot(num_ref[...], wm_ref[...],
                      preferred_element_type=jnp.float32)            # (tm, mlp_dim) f32

        dtot = vit.shape[-1] + mlp.shape[-1]
        inv_d = 1.0 / dtot
        # LayerNorm over the (virtual) concat [vit | mlp]: stats from both tiles,
        # (x - mu) computed once and reused for the variance (2 reductions, not 3).
        mu = (jnp.sum(vit, axis=-1, keepdims=True)
              + jnp.sum(mlp, axis=-1, keepdims=True)) * inv_d
        vit_c = vit - mu
        mlp_c = mlp - mu
        var = (jnp.sum(vit_c * vit_c, axis=-1, keepdims=True)
               + jnp.sum(mlp_c * mlp_c, axis=-1, keepdims=True)) * inv_d
        inv_std = jax.lax.rsqrt(var + 1e-5)

        y_v = jnp.maximum(vit_c * inv_std * gv_ref[...] + bv_ref[...], 0.0)
        y_m = jnp.maximum(mlp_c * inv_std * gm_ref[...] + bm_ref[...], 0.0)

        out = (jnp.dot(y_v, wov_ref[...], preferred_element_type=jnp.float32)
               + jnp.dot(y_m, wom_ref[...], preferred_element_type=jnp.float32)
               + bo_ref[...])
        o_ref[...] = out.astype(o_ref.dtype)


# ----------------------------------------------------------------------------
# Wrapper: flatten, split/pad params, tile, call the fused kernel
# ----------------------------------------------------------------------------
def combined_model_forward(image_list, number_list, params,
                           *, compute_dtype=jnp.bfloat16):
    n = image_list.shape[0]
    img = image_list.reshape(n, -1).astype(compute_dtype)
    num = number_list.reshape(n, -1).astype(compute_dtype)
    w_vit = params["w_vit"].astype(compute_dtype)
    w_mlp = params["w_mlp"].astype(compute_dtype)

    img_feat = img.shape[1]
    num_feat = num.shape[1]
    vit_dim = w_vit.shape[1]
    mlp_dim = w_mlp.shape[1]
    dtot = vit_dim + mlp_dim
    out_d = params["w_out"].shape[1]

    # Lane-dense output slab: pad out_d up to a multiple of 128 lanes, slice after.
    out_pad = ((out_d + 127) // 128) * 128
    w_out = jnp.pad(params["w_out"].astype(jnp.float32),
                    ((0, 0), (0, out_pad - out_d)))
    b_out = jnp.pad(params["b_out"].astype(jnp.float32),
                    ((0, 0), (0, out_pad - out_d)))

    # torch.cat(dim=1) is absorbed into splitting the head params into vit/mlp halves.
    gamma = params["ln_gamma"].astype(jnp.float32)
    beta = params["ln_beta"].astype(jnp.float32)
    gv, gm = gamma[:, :vit_dim], gamma[:, vit_dim:]
    bv, bm = beta[:, :vit_dim], beta[:, vit_dim:]
    wov, wom = w_out[:vit_dim], w_out[vit_dim:]

    # Row tile (parallel axis) and K tile for the streamed image projection.
    tm = 128 if n % 128 == 0 else n           # small-N path keeps the full batch block
    tk = img_feat
    for cand in (512, 256, 128):
        if img_feat % cand == 0:
            tk = cand
            break
    grid = (n // tm, img_feat // tk)

    cbytes = jnp.dtype(compute_dtype).itemsize
    cost = pl.CostEstimate(
        flops=int(2 * n * (img_feat * vit_dim + num_feat * mlp_dim + dtot * out_pad)),
        transcendentals=int(n),
        bytes_accessed=int(
            (img.size + num.size + w_vit.size + w_mlp.size) * cbytes
            + (gv.size + gm.size + bv.size + bm.size
               + wov.size + wom.size + b_out.size + n * out_pad) * 4),
    )

    out = pl.pallas_call(
        _fused_kernel,
        out_shape=jax.ShapeDtypeStruct((n, out_pad), jnp.float32),
        grid_spec=pltpu.PrefetchScalarGridSpec(
            num_scalar_prefetch=0,
            grid=grid,
            in_specs=[
                pl.BlockSpec((tm, tk), lambda i, k: (i, k)),            # img_flat
                pl.BlockSpec((tm, num_feat), lambda i, k: (i, 0)),      # num_flat
                pl.BlockSpec((tk, vit_dim), lambda i, k: (k, 0)),       # w_vit slab
                pl.BlockSpec((num_feat, mlp_dim), lambda i, k: (0, 0)), # w_mlp
                pl.BlockSpec((1, vit_dim), lambda i, k: (0, 0)),        # gamma (vit half)
                pl.BlockSpec((1, mlp_dim), lambda i, k: (0, 0)),        # gamma (mlp half)
                pl.BlockSpec((1, vit_dim), lambda i, k: (0, 0)),        # beta  (vit half)
                pl.BlockSpec((1, mlp_dim), lambda i, k: (0, 0)),        # beta  (mlp half)
                pl.BlockSpec((vit_dim, out_pad), lambda i, k: (0, 0)),  # w_out (vit rows)
                pl.BlockSpec((mlp_dim, out_pad), lambda i, k: (0, 0)),  # w_out (mlp rows)
                pl.BlockSpec((1, out_pad), lambda i, k: (0, 0)),        # b_out
            ],
            out_specs=pl.BlockSpec((tm, out_pad), lambda i, k: (i, 0)),
            scratch_shapes=[pltpu.VMEM((tm, vit_dim), jnp.float32)],    # f32 accumulator
        ),
        compiler_params=pltpu.CompilerParams(
            dimension_semantics=("parallel", "arbitrary"),
            vmem_limit_bytes=32 * 1024 * 1024,
        ),
        cost_estimate=cost,
    )(img, num, w_vit, w_mlp, gv, gm, bv, bm, wov, wom, b_out)

    return out[:, :out_d]                                               # (N, out_d)


# ----------------------------------------------------------------------------
# Pure-JAX reference (same bf16 input rounding as the kernel; exact f32 dots)
# ----------------------------------------------------------------------------
def reference_forward(image_list, number_list, params, *, compute_dtype=jnp.bfloat16):
    n = image_list.shape[0]
    hi = jax.lax.Precision.HIGHEST
    img = image_list.reshape(n, -1).astype(compute_dtype).astype(jnp.float32)
    num = number_list.reshape(n, -1).astype(compute_dtype).astype(jnp.float32)
    wv = params["w_vit"].astype(compute_dtype).astype(jnp.float32)
    wm = params["w_mlp"].astype(compute_dtype).astype(jnp.float32)
    vit = jnp.dot(img, wv, precision=hi)
    mlp = jnp.dot(num, wm, precision=hi)
    x = jnp.concatenate([vit, mlp], axis=1)
    mu = jnp.mean(x, axis=-1, keepdims=True)
    var = jnp.mean((x - mu) ** 2, axis=-1, keepdims=True)
    xn = (x - mu) * jax.lax.rsqrt(var + 1e-5)
    y = jnp.maximum(xn * params["ln_gamma"] + params["ln_beta"], 0.0)
    return jnp.dot(y, params["w_out"], precision=hi) + params["b_out"]


# ----------------------------------------------------------------------------
# Main
# ----------------------------------------------------------------------------
if __name__ == "__main__":
    # Small shapes consistent with the module's forward signature.
    N, SEQ, C, H, W_IMG, D_NUM = 2, 4, 3, 8, 8, 8
    VIT_DIM, MLP_DIM, OUT_D = 32, 16, 1
    DTOT = VIT_DIM + MLP_DIM

    key = jax.random.PRNGKey(0)
    k_img, k_num, k_wv, k_wm, k_g, k_b, k_wo, k_bo = jax.random.split(key, 8)

    image_list = jax.random.normal(k_img, (N, SEQ, C, H, W_IMG), dtype=jnp.float32)
    number_list = jax.random.normal(k_num, (N, SEQ, D_NUM), dtype=jnp.float32)

    img_feat = SEQ * C * H * W_IMG     # 768 -> K-tiled in slabs of 256
    num_feat = SEQ * D_NUM             # 32
    params = {
        "w_vit": jax.random.normal(k_wv, (img_feat, VIT_DIM), jnp.float32) * 0.02,
        "w_mlp": jax.random.normal(k_wm, (num_feat, MLP_DIM), jnp.float32) * 0.1,
        "ln_gamma": 1.0 + 0.1 * jax.random.normal(k_g, (1, DTOT), jnp.float32),
        "ln_beta": 0.1 * jax.random.normal(k_b, (1, DTOT), jnp.float32),
        "w_out": jax.random.normal(k_wo, (DTOT, OUT_D), jnp.float32) * 0.1,
        "b_out": 0.1 * jax.random.normal(k_bo, (1, OUT_D), jnp.float32),
    }

    out = combined_model_forward(image_list, number_list, params)
    out = jax.block_until_ready(out)

    ref = reference_forward(image_list, number_list, params)
    assert out.shape == (N, OUT_D), out.shape
    # bf16 MXU inputs (f32 accumulation) -> small tolerance vs the f32 reference.
    assert jnp.allclose(out, ref, atol=5e-3, rtol=5e-3), (out, ref)

    print("KERNEL_OK")
</pallas_src>

<mosaic_0001>
module attributes {stable_mosaic.version = 11 : i64} {
  func.func @_fused_kernel(%arg0: i32, %arg1: i32, %arg2: memref<2x256xbf16, #tpu.memory_space<vmem>>, %arg3: memref<2x32xbf16, #tpu.memory_space<vmem>>, %arg4: memref<256x32xbf16, #tpu.memory_space<vmem>>, %arg5: memref<32x16xbf16, #tpu.memory_space<vmem>>, %arg6: memref<1x32xf32, #tpu.memory_space<vmem>>, %arg7: memref<1x16xf32, #tpu.memory_space<vmem>>, %arg8: memref<1x32xf32, #tpu.memory_space<vmem>>, %arg9: memref<1x16xf32, #tpu.memory_space<vmem>>, %arg10: memref<32x128xf32, #tpu.memory_space<vmem>>, %arg11: memref<16x128xf32, #tpu.memory_space<vmem>>, %arg12: memref<1x128xf32, #tpu.memory_space<vmem>>, %arg13: memref<2x128xf32, #tpu.memory_space<vmem>>, %arg14: memref<2x32xf32, #tpu.memory_space<vmem>>) attributes {dimension_semantics = [#tpu.dimension_semantics<parallel>, #tpu.dimension_semantics<arbitrary>], iteration_bounds = array<i64: 1, 3>, scalar_prefetch = 0 : i64, scratch_operands = 1 : i64, tpu.core_type = #tpu.core_type<tc>, window_params = [{transform_indices = @transform_0, window_bounds = array<i64: 2, 256>}, {transform_indices = @transform_1, window_bounds = array<i64: 2, 32>}, {transform_indices = @transform_2, window_bounds = array<i64: 256, 32>}, {pipeline_mode = #tpu.pipeline_mode<synchronous>, transform_indices = @transform_3, window_bounds = array<i64: 32, 16>}, {pipeline_mode = #tpu.pipeline_mode<synchronous>, transform_indices = @transform_4, window_bounds = array<i64: 1, 32>}, {pipeline_mode = #tpu.pipeline_mode<synchronous>, transform_indices = @transform_5, window_bounds = array<i64: 1, 16>}, {pipeline_mode = #tpu.pipeline_mode<synchronous>, transform_indices = @transform_6, window_bounds = array<i64: 1, 32>}, {pipeline_mode = #tpu.pipeline_mode<synchronous>, transform_indices = @transform_7, window_bounds = array<i64: 1, 16>}, {pipeline_mode = #tpu.pipeline_mode<synchronous>, transform_indices = @transform_8, window_bounds = array<i64: 32, 128>}, {pipeline_mode = #tpu.pipeline_mode<synchronous>, transform_indices = @transform_9, window_bounds = array<i64: 16, 128>}, {pipeline_mode = #tpu.pipeline_mode<synchronous>, transform_indices = @transform_10, window_bounds = array<i64: 1, 128>}, {transform_indices = @transform_11, window_bounds = array<i64: 2, 128>}]} {
    %c0_i32 = arith.constant 0 : i32
    %0 = arith.cmpi eq, %arg1, %c0_i32 : i32
    %1 = arith.extui %0 : i1 to i32
    %c0_i32_0 = arith.constant 0 : i32
    %2 = arith.cmpi ne, %1, %c0_i32_0 : i32
    scf.if %2 {
      %cst_9 = arith.constant 0.000000e+00 : f32
      %12 = vector.broadcast %cst_9 : f32 to vector<2x32xf32>
      %c0_10 = arith.constant 0 : index
      %c0_11 = arith.constant 0 : index
      %13 = vector.load %arg14[%c0_10, %c0_11] : memref<2x32xf32, #tpu.memory_space<vmem>>, vector<2x32xf32>
      tpu.vector_store %arg14[%c0_10, %c0_11], %12 {strides = array<i32>} : memref<2x32xf32, #tpu.memory_space<vmem>>, vector<2x32xf32>,
    } else {
    }
    %c0 = arith.constant 0 : index
    %c0_1 = arith.constant 0 : index
    %3 = vector.load %arg14[%c0, %c0_1] : memref<2x32xf32, #tpu.memory_space<vmem>>, vector<2x32xf32>
    %c0_2 = arith.constant 0 : index
    %c0_3 = arith.constant 0 : index
    %4 = vector.load %arg2[%c0_2, %c0_3] : memref<2x256xbf16, #tpu.memory_space<vmem>>, vector<2x256xbf16>
    %c0_4 = arith.constant 0 : index
    %c0_5 = arith.constant 0 : index
    %5 = vector.load %arg4[%c0_4, %c0_5] : memref<256x32xbf16, #tpu.memory_space<vmem>>, vector<256x32xbf16>
    %cst = arith.constant dense<0.000000e+00> : vector<2x32xf32>
    %6 = tpu.matmul %4, %5, %cst {dimension_numbers = #tpu.dot_dimension_numbers<[1], [0], [0], [1], [0, 0, 1, 1], [], []>} : vector<2x256xbf16>, vector<256x32xbf16>, vector<2x32xf32> -> vector<2x32xf32>
    %7 = arith.addf %3, %6 : vector<2x32xf32>
    %c0_6 = arith.constant 0 : index
    %c0_7 = arith.constant 0 : index
    %8 = vector.load %arg14[%c0_6, %c0_7] : memref<2x32xf32, #tpu.memory_space<vmem>>, vector<2x32xf32>
    tpu.vector_store %arg14[%c0_6, %c0_7], %7 {strides = array<i32>} : memref<2x32xf32, #tpu.memory_space<vmem>>, vector<2x32xf32>,
    %c2_i32 = arith.constant 2 : i32
    %9 = arith.cmpi eq, %arg1, %c2_i32 : i32
    %10 = arith.extui %9 : i1 to i32
    %c0_i32_8 = arith.constant 0 : i32
    %11 = arith.cmpi ne, %10, %c0_i32_8 : i32
    scf.if %11 {
      %c0_9 = arith.constant 0 : index
      %c0_10 = arith.constant 0 : index
      %12 = vector.load %arg14[%c0_9, %c0_10] : memref<2x32xf32, #tpu.memory_space<vmem>>, vector<2x32xf32>
      %c0_11 = arith.constant 0 : index
      %c0_12 = arith.constant 0 : index
      %13 = vector.load %arg3[%c0_11, %c0_12] : memref<2x32xbf16, #tpu.memory_space<vmem>>, vector<2x32xbf16>
      %c0_13 = arith.constant 0 : index
      %c0_14 = arith.constant 0 : index
      %14 = vector.load %arg5[%c0_13, %c0_14] : memref<32x16xbf16, #tpu.memory_space<vmem>>, vector<32x16xbf16>
      %cst_15 = arith.constant dense<0.000000e+00> : vector<2x16xf32>
      %15 = tpu.matmul %13, %14, %cst_15 {dimension_numbers = #tpu.dot_dimension_numbers<[1], [0], [0], [1], [0, 0, 1, 1], [], []>} : vector<2x32xbf16>, vector<32x16xbf16>, vector<2x16xf32> -> vector<2x16xf32>
      %cst_16 = arith.constant dense<0.000000e+00> : vector<2xf32>
      %16 = vector.multi_reduction <add>, %12, %cst_16 [1] : vector<2x32xf32> to vector<2xf32>
      %17 = vector.shape_cast %16 : vector<2xf32> to vector<2x1xf32>
      %cst_17 = arith.constant dense<0.000000e+00> : vector<2xf32>
      %18 = vector.multi_reduction <add>, %15, %cst_17 [1] : vector<2x16xf32> to vector<2xf32>
      %19 = vector.shape_cast %18 : vector<2xf32> to vector<2x1xf32>
      %20 = arith.addf %17, %19 : vector<2x1xf32>
      %cst_18 = arith.constant 0.020833334 : f32
      %21 = vector.broadcast %cst_18 : f32 to vector<2x1xf32>
      %22 = arith.mulf %20, %21 : vector<2x1xf32>
      %23 = vector.broadcast %22 : vector<2x1xf32> to vector<2x32xf32>
      %24 = arith.subf %12, %23 : vector<2x32xf32>
      %25 = vector.broadcast %22 : vector<2x1xf32> to vector<2x16xf32>
      %26 = arith.subf %15, %25 : vector<2x16xf32>
      %27 = arith.mulf %24, %24 : vector<2x32xf32>
      %cst_19 = arith.constant dense<0.000000e+00> : vector<2xf32>
      %28 = vector.multi_reduction <add>, %27, %cst_19 [1] : vector<2x32xf32> to vector<2xf32>
      %29 = vector.shape_cast %28 : vector<2xf32> to vector<2x1xf32>
      %30 = arith.mulf %26, %26 : vector<2x16xf32>
      %cst_20 = arith.constant dense<0.000000e+00> : vector<2xf32>
      %31 = vector.multi_reduction <add>, %30, %cst_20 [1] : vector<2x16xf32> to vector<2xf32>
      %32 = vector.shape_cast %31 : vector<2xf32> to vector<2x1xf32>
      %33 = arith.addf %29, %32 : vector<2x1xf32>
      %cst_21 = arith.constant 0.020833334 : f32
      %34 = vector.broadcast %cst_21 : f32 to vector<2x1xf32>
      %35 = arith.mulf %33, %34 : vector<2x1xf32>
      %cst_22 = arith.constant 9.99999974E-6 : f32
      %36 = vector.broadcast %cst_22 : f32 to vector<2x1xf32>
      %37 = arith.addf %35, %36 : vector<2x1xf32>
      %38 = math.rsqrt %37 : vector<2x1xf32>
      %39 = vector.broadcast %38 : vector<2x1xf32> to vector<2x32xf32>
      %40 = arith.mulf %24, %39 : vector<2x32xf32>
      %c0_23 = arith.constant 0 : index
      %c0_24 = arith.constant 0 : index
      %41 = vector.load %arg6[%c0_23, %c0_24] : memref<1x32xf32, #tpu.memory_space<vmem>>, vector<1x32xf32>
      %42 = vector.broadcast %41 : vector<1x32xf32> to vector<2x32xf32>
      %43 = arith.mulf %40, %42 : vector<2x32xf32>
      %c0_25 = arith.constant 0 : index
      %c0_26 = arith.constant 0 : index
      %44 = vector.load %arg8[%c0_25, %c0_26] : memref<1x32xf32, #tpu.memory_space<vmem>>, vector<1x32xf32>
      %45 = vector.broadcast %44 : vector<1x32xf32> to vector<2x32xf32>
      %46 = arith.addf %43, %45 : vector<2x32xf32>
      %cst_27 = arith.constant 0.000000e+00 : f32
      %47 = vector.broadcast %cst_27 : f32 to vector<2x32xf32>
      %48 = arith.maximumf %46, %47 : vector<2x32xf32>
      %49 = vector.broadcast %38 : vector<2x1xf32> to vector<2x16xf32>
      %50 = arith.mulf %26, %49 : vector<2x16xf32>
      %c0_28 = arith.constant 0 : index
      %c0_29 = arith.constant 0 : index
      %51 = vector.load %arg7[%c0_28, %c0_29] : memref<1x16xf32, #tpu.memory_space<vmem>>, vector<1x16xf32>
      %52 = vector.broadcast %51 : vector<1x16xf32> to vector<2x16xf32>
      %53 = arith.mulf %50, %52 : vector<2x16xf32>
      %c0_30 = arith.constant 0 : index
      %c0_31 = arith.constant 0 : index
      %54 = vector.load %arg9[%c0_30, %c0_31] : memref<1x16xf32, #tpu.memory_space<vmem>>, vector<1x16xf32>
      %55 = vector.broadcast %54 : vector<1x16xf32> to vector<2x16xf32>
      %56 = arith.addf %53, %55 : vector<2x16xf32>
      %cst_32 = arith.constant 0.000000e+00 : f32
      %57 = vector.broadcast %cst_32 : f32 to vector<2x16xf32>
      %58 = arith.maximumf %56, %57 : vector<2x16xf32>
      %c0_33 = arith.constant 0 : index
      %c0_34 = arith.constant 0 : index
      %59 = vector.load %arg10[%c0_33, %c0_34] : memref<32x128xf32, #tpu.memory_space<vmem>>, vector<32x128xf32>
      %cst_35 = arith.constant dense<0.000000e+00> : vector<2x128xf32>
      %60 = tpu.matmul %48, %59, %cst_35 {dimension_numbers = #tpu.dot_dimension_numbers<[1], [0], [0], [1], [0, 0, 1, 1], [], []>} : vector<2x32xf32>, vector<32x128xf32>, vector<2x128xf32> -> vector<2x128xf32>
      %c0_36 = arith.constant 0 : index
      %c0_37 = arith.constant 0 : index
      %61 = vector.load %arg11[%c0_36, %c0_37] : memref<16x128xf32, #tpu.memory_space<vmem>>, vector<16x128xf32>
      %cst_38 = arith.constant dense<0.000000e+00> : vector<2x128xf32>
      %62 = tpu.matmul %58, %61, %cst_38 {dimension_numbers = #tpu.dot_dimension_numbers<[1], [0], [0], [1], [0, 0, 1, 1], [], []>} : vector<2x16xf32>, vector<16x128xf32>, vector<2x128xf32> -> vector<2x128xf32>
      %63 = arith.addf %60, %62 : vector<2x128xf32>
      %c0_39 = arith.constant 0 : index
      %c0_40 = arith.constant 0 : index
      %64 = vector.load %arg12[%c0_39, %c0_40] : memref<1x128xf32, #tpu.memory_space<vmem>>, vector<1x128xf32>
      %65 = vector.broadcast %64 : vector<1x128xf32> to vector<2x128xf32>
      %66 = arith.addf %63, %65 : vector<2x128xf32>
      %c0_41 = arith.constant 0 : index
      %c0_42 = arith.constant 0 : index
      %67 = vector.load %arg13[%c0_41, %c0_42] : memref<2x128xf32, #tpu.memory_space<vmem>>, vector<2x128xf32>
      tpu.vector_store %arg13[%c0_41, %c0_42], %66 {strides = array<i32>} : memref<2x128xf32, #tpu.memory_space<vmem>>, vector<2x128xf32>,
    } else {
    }
    return
  }
  func.func @transform_0(%arg0: i32, %arg1: i32) -> (i32, i32) {
    %c0_i32 = arith.constant 0 : i32
    return %arg0, %arg1 : i32, i32
  }
  func.func @transform_1(%arg0: i32, %arg1: i32) -> (i32, i32) {
    %c0_i32 = arith.constant 0 : i32
    %c0_i32_0 = arith.constant 0 : i32
    return %arg0, %c0_i32 : i32, i32
  }
  func.func @transform_2(%arg0: i32, %arg1: i32) -> (i32, i32) {
    %c0_i32 = arith.constant 0 : i32
    %c0_i32_0 = arith.constant 0 : i32
    return %arg1, %c0_i32 : i32, i32
  }
  func.func @transform_3(%arg0: i32, %arg1: i32) -> (i32, i32) {
    %c0_i32 = arith.constant 0 : i32
    %c0_i32_0 = arith.constant 0 : i32
    %c0_i32_1 = arith.constant 0 : i32
    return %c0_i32, %c0_i32_0 : i32, i32
  }
  func.func @transform_4(%arg0: i32, %arg1: i32) -> (i32, i32) {
    %c0_i32 = arith.constant 0 : i32
    %c0_i32_0 = arith.constant 0 : i32
    %c0_i32_1 = arith.constant 0 : i32
    return %c0_i32, %c0_i32_0 : i32, i32
  }
  func.func @transform_5(%arg0: i32, %arg1: i32) -> (i32, i32) {
    %c0_i32 = arith.constant 0 : i32
    %c0_i32_0 = arith.constant 0 : i32
    %c0_i32_1 = arith.constant 0 : i32
    return %c0_i32, %c0_i32_0 : i32, i32
  }
  func.func @transform_6(%arg0: i32, %arg1: i32) -> (i32, i32) {
    %c0_i32 = arith.constant 0 : i32
    %c0_i32_0 = arith.constant 0 : i32
    %c0_i32_1 = arith.constant 0 : i32
    return %c0_i32, %c0_i32_0 : i32, i32
  }
  func.func @transform_7(%arg0: i32, %arg1: i32) -> (i32, i32) {
    %c0_i32 = arith.constant 0 : i32
    %c0_i32_0 = arith.constant 0 : i32
    %c0_i32_1 = arith.constant 0 : i32
    return %c0_i32, %c0_i32_0 : i32, i32
  }
  func.func @transform_8(%arg0: i32, %arg1: i32) -> (i32, i32) {
    %c0_i32 = arith.constant 0 : i32
    %c0_i32_0 = arith.constant 0 : i32
    %c0_i32_1 = arith.constant 0 : i32
    return %c0_i32, %c0_i32_0 : i32, i32
  }
  func.func @transform_9(%arg0: i32, %arg1: i32) -> (i32, i32) {
    %c0_i32 = arith.constant 0 : i32
    %c0_i32_0 = arith.constant 0 : i32
    %c0_i32_1 = arith.constant 0 : i32
    return %c0_i32, %c0_i32_0 : i32, i32
  }
  func.func @transform_10(%arg0: i32, %arg1: i32) -> (i32, i32) {
    %c0_i32 = arith.constant 0 : i32
    %c0_i32_0 = arith.constant 0 : i32
    %c0_i32_1 = arith.constant 0 : i32
    return %c0_i32, %c0_i32_0 : i32, i32
  }
  func.func @transform_11(%arg0: i32, %arg1: i32) -> (i32, i32) {
    %c0_i32 = arith.constant 0 : i32
    %c0_i32_0 = arith.constant 0 : i32
    return %arg0, %c0_i32 : i32, i32
  }
}

</mosaic_0001>

<llo_original>
// kernel: tpu_custom_call.1
$region0: #{tpu_custom_call.1}
  #allocation0 [shape = 'u32[]', space=smem, size = 0x4, offset = 0x4, fixed_abs, tag = 'smem constant byte address 0x4 - core index']
  #allocation1 [shape = 'u32[144,128]{1,0:T(1,128)}', space=vmem, size = 0x12000, scoped, tag = 'internal scratch']
  #allocation2 [shape = 'f32[2,32]{1,0:T(2,128)}', space=vmem, size = 0x400, scoped, tag = 'scratch operand']
  %s0 = inlined_call_operand.vmem [shape: bf16[2,768], index: 0, kind: input, shape index: {}]
  %s1 = inlined_call_operand.vmem [shape: bf16[2,32], index: 1, kind: input, shape index: {}]
  %s2 = inlined_call_operand.vmem [shape: bf16[768,32], index: 2, kind: input, shape index: {}]
  %s3 = inlined_call_operand.vmem [shape: bf16[32,16], index: 3, kind: input, shape index: {}]
  %s4 = inlined_call_operand.vmem [shape: f32[1,32], index: 4, kind: input, shape index: {}]
  %s5 = inlined_call_operand.vmem [shape: f32[1,16], index: 5, kind: input, shape index: {}]
  %s6 = inlined_call_operand.vmem [shape: f32[1,32], index: 6, kind: input, shape index: {}]
  %s7 = inlined_call_operand.vmem [shape: f32[1,16], index: 7, kind: input, shape index: {}]
  %s8 = inlined_call_operand.vmem [shape: f32[32,128], index: 8, kind: input, shape index: {}]
  %s9 = inlined_call_operand.vmem [shape: f32[16,128], index: 9, kind: input, shape index: {}]
  %s10 = inlined_call_operand.vmem [shape: f32[1,128], index: 10, kind: input, shape index: {}]
  %s11 = inlined_call_operand.hbm [shape: f32[2,128], index: 11, kind: output, shape index: {}]
  %s12 = sld [smem:[#allocation0]]
  $region85: #{tpu_custom_call.1} parent=0
    _
  %s14 = ssub.s32 1, %s12
  %s15 = scalar_select 0, %s14, %s12
  $region1: #{tpu_custom_call.1} parent=0
    #allocation3 [shape = 'u8[1024]{0}', space=vmem, size = 0x400, scoped, tag = 'output window, operand 0, single buffered']
    #allocation4 [shape = 's32[2]{0}', space=sflag, size = 0x8, scoped, tag = 'scoped memory for tpu_custom_call.1']
    %16 = vsyncpa [#allocation4], 0
    loop: start=0, step=1, limit=5
    $region2: #{tpu_custom_call.1} parent=1 // loop_pre_header
      _
    $region3: #{tpu_custom_call.1} parent=1 // loop_header
      %s18 = sphi 0, %s22
      %p19 = scmp.ge.s32.totalorder %s18, 5
      %s25 = sphi 0, %s37
      %s26 = sphi 0, %s33
      %s27 = sphi 0, %s25
      %s28 = sphi 0, %s26
      %s29 = sphi 0, %s27
      %s30 = sphi 0, %s28
      %s42 = sphi 0, %s44
      %s45 = sphi 0, %s42
      %s46 = sphi 0, %s45
      %s62 = sphi 0, %s46
      %s68 = sphi 0, %s70
      %s71 = sphi 0, %s68
      %s72 = sphi 0, %s71
      %s88 = sphi 0, %s72
      %s94 = sphi 0, %s96
      %s97 = sphi 0, %s94
      %s98 = sphi 0, %s97
      %s114 = sphi 0, %s98
      %s118 = sphi 0, %s118
      %s120 = sphi 0, %s118
      %s121 = sphi 0, %s120
      %s135 = sphi 0, %s121
      %s139 = sphi 0, %s139
      %s141 = sphi 0, %s139
      %s142 = sphi 0, %s141
      %s156 = sphi 0, %s142
      %s160 = sphi 0, %s160
      %s162 = sphi 0, %s160
      %s163 = sphi 0, %s162
      %s177 = sphi 0, %s163
      %s181 = sphi 0, %s181
      %s183 = sphi 0, %s181
      %s184 = sphi 0, %s183
      %s198 = sphi 0, %s184
      %s202 = sphi 0, %s202
      %s204 = sphi 0, %s202
      %s205 = sphi 0, %s204
      %s219 = sphi 0, %s205
      %s223 = sphi 0, %s223
      %s225 = sphi 0, %s223
      %s226 = sphi 0, %s225
      %s240 = sphi 0, %s226
      %s244 = sphi 0, %s244
      %s246 = sphi 0, %s244
      %s247 = sphi 0, %s246
      %s261 = sphi 0, %s247
      %s265 = sphi 0, %s265
      %s267 = sphi 0, %s265
      %s268 = sphi 0, %s267
      %s282 = sphi 0, %s268
      %s288 = sphi 0, %s290
      %s291 = sphi 0, %s288
      %s292 = sphi 0, %s291
      %s308 = sphi 0, %s292
    $region4: #{tpu_custom_call.1} parent=1 // loop_header_branch
      %21 = sbr.rel (%p19) target = $region8
    $region5: #{tpu_custom_call.1} parent=1 // loop_body
      %s23 = ssub.s32 %s18, 1
      %s24 = ssub.s32 %s18, 2
      %s31 = sadd.s32 1, %s26
      %p32 = scmp.ge.s32.totalorder %s31, 3
      %s33 = scalar_select %p32, 0, %s31
      %s34 = sadd.s32 1, %s25
      %s35 = scalar_select %p32, %s34, %s25
      %p36 = scmp.ge.s32.totalorder %s35, 1
      %s37 = scalar_select %p36, 0, %s35
      %s38 = ssub.s32 %s25, %s37
      %s39 = ssub.s32 %s26, %s33
      %s40 = sor.u32 %s38, %s39
      %p41 = scmp.eq.s32.totalorder %s40, 0
      %s43 = sadd.s32 %s42, 1
      %s44 = scalar_select %p41, %s42, %s43
      %p47 = pneg %p41
      %p48 = scmp.eq.s32.totalorder %s18, 2
      %p49 = por %p47, %p48
      %p50 = scmp.ne.s32.totalorder %s42, %s45
      %p51 = scmp.eq.s32.totalorder %s18, 0
      %p52 = por %p50, %p51
      %p53 = scmp.ne.s32.totalorder %s42, %s45
      %p54 = scmp.eq.s32.totalorder %s23, 2
      %p55 = por %p53, %p54
      %p56 = scmp.ne.s32.totalorder %s45, %s46
      %p57 = scmp.eq.s32.totalorder %s23, 0
      %p58 = por %p56, %p57
      %p59 = scmp.ne.s32.totalorder %s45, %s46
      %p60 = scmp.eq.s32.totalorder %s24, 2
      %p61 = por %p59, %p60
      %p63 = scmp.ne.s32.totalorder %s46, %s62
      %p64 = scmp.eq.s32.totalorder %s24, 0
      %p65 = por %p63, %p64
      %s66 = ssub.s32 %s25, %s37
      %p67 = scmp.eq.s32.totalorder %s66, 0
      %s69 = sadd.s32 %s68, 1
      %s70 = scalar_select %p67, %s68, %s69
      %p73 = pneg %p67
      %p74 = scmp.eq.s32.totalorder %s18, 2
      %p75 = por %p73, %p74
      %p76 = scmp.ne.s32.totalorder %s68, %s71
      %p77 = scmp.eq.s32.totalorder %s18, 0
      %p78 = por %p76, %p77
      %p79 = scmp.ne.s32.totalorder %s68, %s71
      %p80 = scmp.eq.s32.totalorder %s23, 2
      %p81 = por %p79, %p80
      %p82 = scmp.ne.s32.totalorder %s71, %s72
      %p83 = scmp.eq.s32.totalorder %s23, 0
      %p84 = por %p82, %p83
      %p85 = scmp.ne.s32.totalorder %s71, %s72
      %p86 = scmp.eq.s32.totalorder %s24, 2
      %p87 = por %p85, %p86
      %p89 = scmp.ne.s32.totalorder %s72, %s88
      %p90 = scmp.eq.s32.totalorder %s24, 0
      %p91 = por %p89, %p90
      %s92 = ssub.s32 %s26, %s33
      %p93 = scmp.eq.s32.totalorder %s92, 0
      %s95 = sadd.s32 %s94, 1
      %s96 = scalar_select %p93, %s94, %s95
      %p99 = pneg %p93
      %p100 = scmp.eq.s32.totalorder %s18, 2
      %p101 = por %p99, %p100
      %p102 = scmp.ne.s32.totalorder %s94, %s97
      %p103 = scmp.eq.s32.totalorder %s18, 0
      %p104 = por %p102, %p103
      %p105 = scmp.ne.s32.totalorder %s94, %s97
      %p106 = scmp.eq.s32.totalorder %s23, 2
      %p107 = por %p105, %p106
      %p108 = scmp.ne.s32.totalorder %s97, %s98
      %p109 = scmp.eq.s32.totalorder %s23, 0
      %p110 = por %p108, %p109
      %p111 = scmp.ne.s32.totalorder %s97, %s98
      %p112 = scmp.eq.s32.totalorder %s24, 2
      %p113 = por %p111, %p112
      %p115 = scmp.ne.s32.totalorder %s98, %s114
      %p116 = scmp.eq.s32.totalorder %s24, 0
      %p117 = por %p115, %p116
      %s119 = sadd.s32 %s118, 1
      %p122 = scmp.eq.s32.totalorder %s18, 2
      %p123 = scmp.ne.s32.totalorder %s118, %s120
      %p124 = scmp.eq.s32.totalorder %s18, 0
      %p125 = por %p123, %p124
      %p126 = scmp.ne.s32.totalorder %s118, %s120
      %p127 = scmp.eq.s32.totalorder %s23, 2
      %p128 = por %p126, %p127
      %p129 = scmp.ne.s32.totalorder %s120, %s121
      %p130 = scmp.eq.s32.totalorder %s23, 0
      %p131 = por %p129, %p130
      %p132 = scmp.ne.s32.totalorder %s120, %s121
      %p133 = scmp.eq.s32.totalorder %s24, 2
      %p134 = por %p132, %p133
      %p136 = scmp.ne.s32.totalorder %s121, %s135
      %p137 = scmp.eq.s32.totalorder %s24, 0
      %p138 = por %p136, %p137
      %s140 = sadd.s32 %s139, 1
      %p143 = scmp.eq.s32.totalorder %s18, 2
      %p144 = scmp.ne.s32.totalorder %s139, %s141
      %p145 = scmp.eq.s32.totalorder %s18, 0
      %p146 = por %p144, %p145
      %p147 = scmp.ne.s32.totalorder %s139, %s141
      %p148 = scmp.eq.s32.totalorder %s23, 2
      %p149 = por %p147, %p148
      %p150 = scmp.ne.s32.totalorder %s141, %s142
      %p151 = scmp.eq.s32.totalorder %s23, 0
      %p152 = por %p150, %p151
      %p153 = scmp.ne.s32.totalorder %s141, %s142
      %p154 = scmp.eq.s32.totalorder %s24, 2
      %p155 = por %p153, %p154
      %p157 = scmp.ne.s32.totalorder %s142, %s156
      %p158 = scmp.eq.s32.totalorder %s24, 0
      %p159 = por %p157, %p158
      %s161 = sadd.s32 %s160, 1
      %p164 = scmp.eq.s32.totalorder %s18, 2
      %p165 = scmp.ne.s32.totalorder %s160, %s162
      %p166 = scmp.eq.s32.totalorder %s18, 0
      %p167 = por %p165, %p166
      %p168 = scmp.ne.s32.totalorder %s160, %s162
      %p169 = scmp.eq.s32.totalorder %s23, 2
      %p170 = por %p168, %p169
      %p171 = scmp.ne.s32.totalorder %s162, %s163
      %p172 = scmp.eq.s32.totalorder %s23, 0
      %p173 = por %p171, %p172
      %p174 = scmp.ne.s32.totalorder %s162, %s163
      %p175 = scmp.eq.s32.totalorder %s24, 2
      %p176 = por %p174, %p175
      %p178 = scmp.ne.s32.totalorder %s163, %s177
      %p179 = scmp.eq.s32.totalorder %s24, 0
      %p180 = por %p178, %p179
      %s182 = sadd.s32 %s181, 1
      %p185 = scmp.eq.s32.totalorder %s18, 2
      %p186 = scmp.ne.s32.totalorder %s181, %s183
      %p187 = scmp.eq.s32.totalorder %s18, 0
      %p188 = por %p186, %p187
      %p189 = scmp.ne.s32.totalorder %s181, %s183
      %p190 = scmp.eq.s32.totalorder %s23, 2
      %p191 = por %p189, %p190
      %p192 = scmp.ne.s32.totalorder %s183, %s184
      %p193 = scmp.eq.s32.totalorder %s23, 0
      %p194 = por %p192, %p193
      %p195 = scmp.ne.s32.totalorder %s183, %s184
      %p196 = scmp.eq.s32.totalorder %s24, 2
      %p197 = por %p195, %p196
      %p199 = scmp.ne.s32.totalorder %s184, %s198
      %p200 = scmp.eq.s32.totalorder %s24, 0
      %p201 = por %p199, %p200
      %s203 = sadd.s32 %s202, 1
      %p206 = scmp.eq.s32.totalorder %s18, 2
      %p207 = scmp.ne.s32.totalorder %s202, %s204
      %p208 = scmp.eq.s32.totalorder %s18, 0
      %p209 = por %p207, %p208
      %p210 = scmp.ne.s32.totalorder %s202, %s204
      %p211 = scmp.eq.s32.totalorder %s23, 2
      %p212 = por %p210, %p211
      %p213 = scmp.ne.s32.totalorder %s204, %s205
      %p214 = scmp.eq.s32.totalorder %s23, 0
      %p215 = por %p213, %p214
      %p216 = scmp.ne.s32.totalorder %s204, %s205
      %p217 = scmp.eq.s32.totalorder %s24, 2
      %p218 = por %p216, %p217
      %p220 = scmp.ne.s32.totalorder %s205, %s219
      %p221 = scmp.eq.s32.totalorder %s24, 0
      %p222 = por %p220, %p221
      %s224 = sadd.s32 %s223, 1
      %p227 = scmp.eq.s32.totalorder %s18, 2
      %p228 = scmp.ne.s32.totalorder %s223, %s225
      %p229 = scmp.eq.s32.totalorder %s18, 0
      %p230 = por %p228, %p229
      %p231 = scmp.ne.s32.totalorder %s223, %s225
      %p232 = scmp.eq.s32.totalorder %s23, 2
      %p233 = por %p231, %p232
      %p234 = scmp.ne.s32.totalorder %s225, %s226
      %p235 = scmp.eq.s32.totalorder %s23, 0
      %p236 = por %p234, %p235
      %p237 = scmp.ne.s32.totalorder %s225, %s226
      %p238 = scmp.eq.s32.totalorder %s24, 2
      %p239 = por %p237, %p238
      %p241 = scmp.ne.s32.totalorder %s226, %s240
      %p242 = scmp.eq.s32.totalorder %s24, 0
      %p243 = por %p241, %p242
      %s245 = sadd.s32 %s244, 1
      %p248 = scmp.eq.s32.totalorder %s18, 2
      %p249 = scmp.ne.s32.totalorder %s244, %s246
      %p250 = scmp.eq.s32.totalorder %s18, 0
      %p251 = por %p249, %p250
      %p252 = scmp.ne.s32.totalorder %s244, %s246
      %p253 = scmp.eq.s32.totalorder %s23, 2
      %p254 = por %p252, %p253
      %p255 = scmp.ne.s32.totalorder %s246, %s247
      %p256 = scmp.eq.s32.totalorder %s23, 0
      %p257 = por %p255, %p256
      %p258 = scmp.ne.s32.totalorder %s246, %s247
      %p259 = scmp.eq.s32.totalorder %s24, 2
      %p260 = por %p258, %p259
      %p262 = scmp.ne.s32.totalorder %s247, %s261
      %p263 = scmp.eq.s32.totalorder %s24, 0
      %p264 = por %p262, %p263
      %s266 = sadd.s32 %s265, 1
      %p269 = scmp.eq.s32.totalorder %s18, 2
      %p270 = scmp.ne.s32.totalorder %s265, %s267
      %p271 = scmp.eq.s32.totalorder %s18, 0
      %p272 = por %p270, %p271
      %p273 = scmp.ne.s32.totalorder %s265, %s267
      %p274 = scmp.eq.s32.totalorder %s23, 2
      %p275 = por %p273, %p274
      %p276 = scmp.ne.s32.totalorder %s267, %s268
      %p277 = scmp.eq.s32.totalorder %s23, 0
      %p278 = por %p276, %p277
      %p279 = scmp.ne.s32.totalorder %s267, %s268
      %p280 = scmp.eq.s32.totalorder %s24, 2
      %p281 = por %p279, %p280
      %p283 = scmp.ne.s32.totalorder %s268, %s282
      %p284 = scmp.eq.s32.totalorder %s24, 0
      %p285 = por %p283, %p284
      %s286 = ssub.s32 %s25, %s37
      %p287 = scmp.eq.s32.totalorder %s286, 0
      %s289 = sadd.s32 %s288, 1
      %s290 = scalar_select %p287, %s288, %s289
      %p293 = pneg %p287
      %p294 = scmp.eq.s32.totalorder %s18, 2
      %p295 = por %p293, %p294
      %p296 = scmp.ne.s32.totalorder %s288, %s291
      %p297 = scmp.eq.s32.totalorder %s18, 0
      %p298 = por %p296, %p297
      %p299 = scmp.ne.s32.totalorder %s288, %s291
      %p300 = scmp.eq.s32.totalorder %s23, 2
      %p301 = por %p299, %p300
      %p302 = scmp.ne.s32.totalorder %s291, %s292
      %p303 = scmp.eq.s32.totalorder %s23, 0
      %p304 = por %p302, %p303
      %p305 = scmp.ne.s32.totalorder %s291, %s292
      %p306 = scmp.eq.s32.totalorder %s24, 2
      %p307 = por %p305, %p306
      %p309 = scmp.ne.s32.totalorder %s292, %s308
      %p310 = scmp.eq.s32.totalorder %s24, 0
      %p311 = por %p309, %p310
      %p312 = scmp.le.s32.totalorder 1, %s18
      %p313 = scmp.lt.s32.totalorder %s18, 4
      %p314 = pnand %p312, %p313
      %p315 = pneg %p314
      // Predicated region
      $region9: #{tpu_custom_call.1} parent=5 // pred_check
        _
      $region10: #{tpu_custom_call.1} parent=5 // pred_check_branch
        %317 = sbr.rel (%p314) target = $region12
      $region11: #{tpu_custom_call.1} parent=5 // pred_region
        %s318 = ssub.s32 %s18, 1
        // Predicated region
        $region13: #{tpu_custom_call.1} parent=11 // pred_check
          %p319 = pneg %p84
        $region14: #{tpu_custom_call.1} parent=11 // pred_check_branch
          %321 = sbr.rel (%p319) target = $region16
        $region15: #{tpu_custom_call.1} parent=11 // pred_region
          %p322 = scmp.lt.s32.totalorder %s27, 0
          %s323 = scalar_select %p322, %s27, 0
          %s324 = scalar_lea.vmem %s1, %s323
        $region16: #{tpu_custom_call.1} parent=11 // pred_fallthru
          _
        // Predicated region
        $region17: #{tpu_custom_call.1} parent=11 // pred_check
          %p325 = pneg %p131
        $region18: #{tpu_custom_call.1} parent=11 // pred_check_branch
          %327 = sbr.rel (%p325) target = $region20
        $region19: #{tpu_custom_call.1} parent=11 // pred_region
          _
        $region20: #{tpu_custom_call.1} parent=11 // pred_fallthru
          _
        // Predicated region
        $region21: #{tpu_custom_call.1} parent=11 // pred_check
          %p328 = pneg %p152
        $region22: #{tpu_custom_call.1} parent=11 // pred_check_branch
          %330 = sbr.rel (%p328) target = $region24
        $region23: #{tpu_custom_call.1} parent=11 // pred_region
          _
        $region24: #{tpu_custom_call.1} parent=11 // pred_fallthru
          _
        // Predicated region
        $region25: #{tpu_custom_call.1} parent=11 // pred_check
          %p331 = pneg %p173
        $region26: #{tpu_custom_call.1} parent=11 // pred_check_branch
          %333 = sbr.rel (%p331) target = $region28
        $region27: #{tpu_custom_call.1} parent=11 // pred_region
          _
        $region28: #{tpu_custom_call.1} parent=11 // pred_fallthru
          _
        // Predicated region
        $region29: #{tpu_custom_call.1} parent=11 // pred_check
          %p334 = pneg %p194
        $region30: #{tpu_custom_call.1} parent=11 // pred_check_branch
          %336 = sbr.rel (%p334) target = $region32
        $region31: #{tpu_custom_call.1} parent=11 // pred_region
          _
        $region32: #{tpu_custom_call.1} parent=11 // pred_fallthru
          _
        // Predicated region
        $region33: #{tpu_custom_call.1} parent=11 // pred_check
          %p337 = pneg %p215
        $region34: #{tpu_custom_call.1} parent=11 // pred_check_branch
          %339 = sbr.rel (%p337) target = $region36
        $region35: #{tpu_custom_call.1} parent=11 // pred_region
          _
        $region36: #{tpu_custom_call.1} parent=11 // pred_fallthru
          _
        // Predicated region
        $region37: #{tpu_custom_call.1} parent=11 // pred_check
          %p340 = pneg %p236
        $region38: #{tpu_custom_call.1} parent=11 // pred_check_branch
          %342 = sbr.rel (%p340) target = $region40
        $region39: #{tpu_custom_call.1} parent=11 // pred_region
          _
        $region40: #{tpu_custom_call.1} parent=11 // pred_fallthru
          _
        // Predicated region
        $region41: #{tpu_custom_call.1} parent=11 // pred_check
          %p343 = pneg %p257
        $region42: #{tpu_custom_call.1} parent=11 // pred_check_branch
          %345 = sbr.rel (%p343) target = $region44
        $region43: #{tpu_custom_call.1} parent=11 // pred_region
          _
        $region44: #{tpu_custom_call.1} parent=11 // pred_fallthru
          _
        // Predicated region
        $region45: #{tpu_custom_call.1} parent=11 // pred_check
          %p346 = pneg %p278
        $region46: #{tpu_custom_call.1} parent=11 // pred_check_branch
          %348 = sbr.rel (%p346) target = $region48
        $region47: #{tpu_custom_call.1} parent=11 // pred_region
          _
        $region48: #{tpu_custom_call.1} parent=11 // pred_fallthru
          _
      $region12: #{tpu_custom_call.1} parent=5 // pred_fallthru
        _
      %p349 = scmp.lt.s32.totalorder %s18, 3
      // Predicated region
      $region49: #{tpu_custom_call.1} parent=5 // pred_check
        %p350 = pneg %p349
      $region50: #{tpu_custom_call.1} parent=5 // pred_check_branch
        %352 = sbr.rel (%p350) target = $region52
      $region51: #{tpu_custom_call.1} parent=5 // pred_region
        // Predicated region
        $region53: #{tpu_custom_call.1} parent=51 // pred_check
          %p353 = pneg %p52
        $region54: #{tpu_custom_call.1} parent=51 // pred_check_branch
          %355 = sbr.rel (%p353) target = $region56
        $region55: #{tpu_custom_call.1} parent=51 // pred_region
          %s356 = smul.u32 2, %s26
          %p357 = scmp.lt.s32.totalorder %s25, 0
          %s358 = scalar_select %p357, %s25, 0
          %p359 = scmp.lt.s32.totalorder %s356, 5
          %s360 = scalar_select %p359, %s356, 5
          %s361 = smul.addr %s358, 6
          %s362 = sadd.s32 %s360, %s361
          %s363 = scalar_lea.vmem %s0, %s362
          %s364 = smul.u32 2, %s26
        $region56: #{tpu_custom_call.1} parent=51 // pred_fallthru
          _
        // Predicated region
        $region57: #{tpu_custom_call.1} parent=51 // pred_check
          %p365 = pneg %p104
        $region58: #{tpu_custom_call.1} parent=51 // pred_check_branch
          %367 = sbr.rel (%p365) target = $region60
        $region59: #{tpu_custom_call.1} parent=51 // pred_region
          %s368 = smul.u32 32, %s26
          %p369 = scmp.lt.s32.totalorder %s368, 95
          %s370 = scalar_select %p369, %s368, 95
          %s371 = smul.addr %s370, 4
          %s372 = scalar_lea.vmem %s2, %s371
          %s373 = smul.u32 32, %s26
        $region60: #{tpu_custom_call.1} parent=51 // pred_fallthru
          _
      $region52: #{tpu_custom_call.1} parent=5 // pred_fallthru
        _
      %p374 = scmp.le.s32.totalorder 1, %s18
      %p375 = scmp.lt.s32.totalorder %s18, 4
      %p376 = pnand %p374, %p375
      %p377 = pneg %p376
      // Predicated region
      $region61: #{tpu_custom_call.1} parent=5 // pred_check
        _
      $region62: #{tpu_custom_call.1} parent=5 // pred_check_branch
        %379 = sbr.rel (%p376) target = $region64
      $region63: #{tpu_custom_call.1} parent=5 // pred_region
        %s380 = ssub.s32 %s18, 1
        %s381 = smul.u32 2, %s28
        %p382 = scmp.lt.s32.totalorder %s27, 0
        %s383 = scalar_select %p382, %s27, 0
        %p384 = scmp.lt.s32.totalorder %s381, 5
        %s385 = scalar_select %p384, %s381, 5
        %s386 = smul.addr %s383, 6
        %s387 = sadd.s32 %s385, %s386
        %s388 = scalar_lea.vmem %s0, %s387
        %p389 = pneg %p58
        %p390 = pneg %p55
        %p391 = scmp.lt.s32.totalorder %s27, 0
        %s392 = scalar_select %p391, %s27, 0
        %s393 = scalar_lea.vmem %s1, %s392
        %p394 = pneg %p84
        %p395 = pneg %p81
        %s396 = smul.u32 32, %s28
        %p397 = scmp.lt.s32.totalorder %s396, 95
        %s398 = scalar_select %p397, %s396, 95
        %s399 = smul.addr %s398, 4
        %s400 = scalar_lea.vmem %s2, %s399
        %p401 = pneg %p110
        %p402 = pneg %p107
        %p403 = pneg %p131
        %p404 = pneg %p128
        %p405 = pneg %p152
        %p406 = pneg %p149
        %p407 = pneg %p173
        %p408 = pneg %p170
        %p409 = pneg %p194
        %p410 = pneg %p191
        %p411 = pneg %p215
        %p412 = pneg %p212
        %p413 = pneg %p236
        %p414 = pneg %p233
        %p415 = pneg %p257
        %p416 = pneg %p254
        %p417 = pneg %p278
        %p418 = pneg %p275
        %p419 = pneg %p304
        %p420 = pneg %p301
        %s421 = smul.u32 2, %s28
        %p422 = scmp.lt.s32.totalorder %s27, 0
        %s423 = scalar_select %p422, %s27, 0
        %p424 = scmp.lt.s32.totalorder %s421, 5
        %s425 = scalar_select %p424, %s421, 5
        %s426 = smul.addr %s423, 6
        %s427 = sadd.s32 %s425, %s426
        %s428 = scalar_lea.vmem %s0, %s427
        %s429 = smul.u32 2, %s28
        %p430 = scmp.lt.s32.totalorder %s27, 0
        %s431 = scalar_select %p430, %s27, 0
        %s432 = scalar_lea.vmem %s1, %s431
        %s433 = smul.u32 32, %s28
        %p434 = scmp.lt.s32.totalorder %s433, 95
        %s435 = scalar_select %p434, %s433, 95
        %s436 = smul.addr %s435, 4
        %s437 = scalar_lea.vmem %s2, %s436
        %s438 = smul.u32 32, %s28
        %p440 = scmp.eq.s32.totalorder %s28, 0
        // Predicated region
        $region65: #{tpu_custom_call.1} parent=63 // pred_check
          %p441 = pneg %p440
        $region66: #{tpu_custom_call.1} parent=63 // pred_check_branch
          %443 = sbr.rel (%p441) target = $region68
        $region67: #{tpu_custom_call.1} parent=63 // pred_region
          %vm444 = vcmask 254976
          %445 = vst.msk [vmem:[#allocation2] sm:$0x3] %vm444, 0.0
        $region68: #{tpu_custom_call.1} parent=63 // pred_fallthru
          _
        %v446 = vld [vmem:[#allocation2] sm:$0x3]
        %v447 = vld [vmem:[%s428] sm:$0x3]
        %v448 = vld [vmem:[%s437] sm:$0xf]
        %v449 = vld [vmem:[%s437 + $0x4] sm:$0xf]
        %v450 = vld [vmem:[%s437 + $0x8] sm:$0xf]
        %v451 = vld [vmem:[%s437 + $0xc] sm:$0xf]
        %v452 = vld [vmem:[%s437 + $0x10] sm:$0xf]
        %v453 = vld [vmem:[%s437 + $0x14] sm:$0xf]
        %v454 = vld [vmem:[%s437 + $0x18] sm:$0xf]
        %v455 = vld [vmem:[%s437 + $0x1c] sm:$0xf]
        %v456 = vld [vmem:[%s437 + $0x20] sm:$0xf]
        %v457 = vld [vmem:[%s437 + $0x24] sm:$0xf]
        %v458 = vld [vmem:[%s437 + $0x28] sm:$0xf]
        %v459 = vld [vmem:[%s437 + $0x2c] sm:$0xf]
        %v460 = vld [vmem:[%s437 + $0x30] sm:$0xf]
        %v461 = vld [vmem:[%s437 + $0x34] sm:$0xf]
        %v462 = vld [vmem:[%s437 + $0x38] sm:$0xf]
        %v463 = vld [vmem:[%s437 + $0x3c] sm:$0xf]
        %v464 = vld [vmem:[%s437 + $0x40] sm:$0xf]
        %v465 = vld [vmem:[%s437 + $0x44] sm:$0xf]
        %v466 = vld [vmem:[%s437 + $0x48] sm:$0xf]
        %v467 = vld [vmem:[%s437 + $0x4c] sm:$0xf]
        %v468 = vld [vmem:[%s437 + $0x50] sm:$0xf]
        %v469 = vld [vmem:[%s437 + $0x54] sm:$0xf]
        %v470 = vld [vmem:[%s437 + $0x58] sm:$0xf]
        %v471 = vld [vmem:[%s437 + $0x5c] sm:$0xf]
        %v472 = vld [vmem:[%s437 + $0x60] sm:$0xf]
        %v473 = vld [vmem:[%s437 + $0x64] sm:$0xf]
        %v474 = vld [vmem:[%s437 + $0x68] sm:$0xf]
        %v475 = vld [vmem:[%s437 + $0x6c] sm:$0xf]
        %v476 = vld [vmem:[%s437 + $0x70] sm:$0xf]
        %v477 = vld [vmem:[%s437 + $0x74] sm:$0xf]
        %v478 = vld [vmem:[%s437 + $0x78] sm:$0xf]
        %v479 = vld [vmem:[%s437 + $0x7c] sm:$0xf]
        %v482 = vunpack.c.l.s4 1966171168
        %v483 = vunpack.c.0.s8 %v482
        %v484 = vlaneseq
        %v485 = vshrl.u32 %v484, 7
        %v486 = vsub.s32 %v483, %v485
        %v487 = vrot.slane %v447, %v486
        %v488 = vcombine.high %v487, %v487
        %v490 = vunpack.c.l.s4 1966171168
        %v491 = vunpack.c.0.s8 %v490
        %v492 = vlaneseq
        %v493 = vshrl.u32 %v492, 7
        %v494 = vsub.s32 %v491, %v493
        %v495 = vrot.slane %v487, %v494
        %v497 = vunpack.c.l.s4 1966171168
        %v498 = vunpack.c.0.s8 %v497
        %v499 = vlaneseq
        %v500 = vshrl.u32 %v499, 7
        %v501 = vsub.s32 %v498, %v500
        %v502 = vrot.slane %v488, %v501
        %v537 = vunpack.c.l.b16 %v448
        %v538 = vunpack.c.l.b16 %v449
        %v539 = vunpack.c.l.b16 %v450
        %v540 = vunpack.c.l.b16 %v451
        %v541 = vunpack.c.l.b16 %v452
        %v542 = vunpack.c.l.b16 %v453
        %v543 = vunpack.c.l.b16 %v454
        %v544 = vunpack.c.l.b16 %v455
        %v545 = vunpack.c.l.b16 %v456
        %v546 = vunpack.c.l.b16 %v457
        %v547 = vunpack.c.l.b16 %v458
        %v548 = vunpack.c.l.b16 %v459
        %v549 = vunpack.c.l.b16 %v460
        %v550 = vunpack.c.l.b16 %v461
        %v551 = vunpack.c.l.b16 %v462
        %v552 = vunpack.c.l.b16 %v463
        %v553 = vunpack.c.l.b16 %v464
        %v554 = vunpack.c.l.b16 %v465
        %v555 = vunpack.c.l.b16 %v466
        %v556 = vunpack.c.l.b16 %v467
        %v557 = vunpack.c.l.b16 %v468
        %v558 = vunpack.c.l.b16 %v469
        %v559 = vunpack.c.l.b16 %v470
        %v560 = vunpack.c.l.b16 %v471
        %v561 = vunpack.c.l.b16 %v472
        %v562 = vunpack.c.l.b16 %v473
        %v563 = vunpack.c.l.b16 %v474
        %v564 = vunpack.c.l.b16 %v475
        %v565 = vunpack.c.l.b16 %v476
        %v566 = vunpack.c.l.b16 %v477
        %v567 = vunpack.c.l.b16 %v478
        %v568 = vunpack.c.l.b16 %v479
        %v569 = vpack.c.b16 %v538, %v537
        %v570 = vpack.c.b16 %v540, %v539
        %v571 = vpack.c.b16 %v542, %v541
        %v572 = vpack.c.b16 %v544, %v543
        %v573 = vpack.c.b16 %v546, %v545
        %v574 = vpack.c.b16 %v548, %v547
        %v575 = vpack.c.b16 %v550, %v549
        %v576 = vpack.c.b16 %v552, %v551
        %v577 = vpack.c.b16 %v554, %v553
        %v578 = vpack.c.b16 %v556, %v555
        %v579 = vpack.c.b16 %v558, %v557
        %v580 = vpack.c.b16 %v560, %v559
        %v581 = vpack.c.b16 %v562, %v561
        %v582 = vpack.c.b16 %v564, %v563
        %v583 = vpack.c.b16 %v566, %v565
        %v584 = vpack.c.b16 %v568, %v567
        %601 = vmatprep.subr.bf16.mxu0 0
        %602 = vmatpush1.bf16.msra.mxu0 %v569
        %603 = vmatprep.subr.bf16.mxu0 0
        %604 = vmatpush1.bf16.msra.mxu0 %v570
        %605 = vmatprep.subr.bf16.mxu0 0
        %606 = vmatpush1.bf16.msra.mxu0 %v571
        %607 = vmatprep.subr.bf16.mxu0 0
        %608 = vmatpush1.bf16.msra.mxu0 %v572
        %609 = vmatprep.subr.bf16.mxu0 0
        %610 = vmatpush1.bf16.msra.mxu0 %v573
        %611 = vmatprep.subr.bf16.mxu0 0
        %612 = vmatpush1.bf16.msra.mxu0 %v574
        %613 = vmatprep.subr.bf16.mxu0 0
        %614 = vmatpush1.bf16.msra.mxu0 %v575
        %615 = vmatprep.subr.bf16.mxu0 0
        %616 = vmatpush1.bf16.msra.mxu0 %v576
        %617 = vmatprep.subr.bf16.mxu0 0
        %618 = vmatpush1.bf16.msra.mxu0 %v577
        %619 = vmatprep.subr.bf16.mxu0 0
        %620 = vmatpush1.bf16.msra.mxu0 %v578
        %621 = vmatprep.subr.bf16.mxu0 0
        %622 = vmatpush1.bf16.msra.mxu0 %v579
        %623 = vmatprep.subr.bf16.mxu0 0
        %624 = vmatpush1.bf16.msra.mxu0 %v580
        %625 = vmatprep.subr.bf16.mxu0 0
        %626 = vmatpush1.bf16.msra.mxu0 %v581
        %627 = vmatprep.subr.bf16.mxu0 0
        %628 = vmatpush1.bf16.msra.mxu0 %v582
        %629 = vmatprep.subr.bf16.mxu0 0
        %630 = vmatpush1.bf16.msra.mxu0 %v583
        %631 = vmatprep.subr.bf16.mxu0 0
        %632 = vmatpush1.bf16.msra.mxu0 %v584
        %633 = vmatprep.mubr.bf16.mxu0 %v502
        %634 = vmatmul.mubr.bf16.gmra.mrb[0].mxu0 %v495
        %v635 = vpop.f32.mrb[0].mxu0
        %v636 = vadd.f32 0.0, %v635
        %v637 = vpop.f32.mrb[0].mxu0
        %v638 = vpop.f32.mrb[0].mxu0
        %v639 = vpop.f32.mrb[0].mxu0
        %640 = vdwg.mxu0
        %v641 = vadd.f32 %v446, %v636
        %vm642 = vcmask 254976
        %643 = vst.msk [vmem:[#allocation2] sm:$0x3] %vm642, %v641
        %p644 = scmp.eq.s32.totalorder %s28, 2
        // Predicated region
        $region69: #{tpu_custom_call.1} parent=63 // pred_check
          %p645 = pneg %p644
        $region70: #{tpu_custom_call.1} parent=63 // pred_check_branch
          %647 = sbr.rel (%p645) target = $region72
        $region71: #{tpu_custom_call.1} parent=63 // pred_region
          %v648 = vld [vmem:[#allocation2] sm:$0x3]
          %v649 = vld [vmem:[%s432] sm:$0x1]
          %v650 = vld [vmem:[%s3] sm:$0xf]
          %v651 = vld [vmem:[%s3 + $0x4] sm:$0xf]
          %v652 = vld [vmem:[%s3 + $0x8] sm:$0xf]
          %v653 = vld [vmem:[%s3 + $0xc] sm:$0xf]
          %v658 = vunpack.c.l.b16 %v650
          %v659 = vunpack.c.l.b16 %v651
          %v660 = vunpack.c.l.b16 %v652
          %v661 = vunpack.c.l.b16 %v653
          %v662 = vpack.c.b16 %v659, %v658
          %v663 = vpack.c.b16 %v661, %v660
          %vm666 = vcmask 261120
          %v668 = vsel %vm666, %v649, 0
          %670 = vmatprep.subr.bf16.mxu0 0
          %671 = vmatpush1.bf16.msra.mxu0 %v662
          %672 = vmatprep.subr.bf16.mxu0 0
          %673 = vmatpush1.bf16.msra.mxu0 %v663
          %674 = vmatprep.subr.bf16.mxu0 0
          %675 = vmatpush1.bf16.msra.mxu0 0
          %676 = vmatprep.subr.bf16.mxu0 0
          %677 = vmatpush1.bf16.msra.mxu0 0
          %678 = vmatprep.subr.bf16.mxu0 0
          %679 = vmatpush1.bf16.msra.mxu0 0
          %680 = vmatprep.subr.bf16.mxu0 0
          %681 = vmatpush1.bf16.msra.mxu0 0
          %682 = vmatprep.subr.bf16.mxu0 0
          %683 = vmatpush1.bf16.msra.mxu0 0
          %684 = vmatprep.subr.bf16.mxu0 0
          %685 = vmatpush1.bf16.msra.mxu0 0
          %686 = vmatprep.subr.bf16.mxu0 0
          %687 = vmatpush1.bf16.msra.mxu0 0
          %688 = vmatprep.subr.bf16.mxu0 0
          %689 = vmatpush1.bf16.msra.mxu0 0
          %690 = vmatprep.subr.bf16.mxu0 0
          %691 = vmatpush1.bf16.msra.mxu0 0
          %692 = vmatprep.subr.bf16.mxu0 0
          %693 = vmatpush1.bf16.msra.mxu0 0
          %694 = vmatprep.subr.bf16.mxu0 0
          %695 = vmatpush1.bf16.msra.mxu0 0
          %696 = vmatprep.subr.bf16.mxu0 0
          %697 = vmatpush1.bf16.msra.mxu0 0
          %698 = vmatprep.subr.bf16.mxu0 0
          %699 = vmatpush1.bf16.msra.mxu0 0
          %700 = vmatprep.subr.bf16.mxu0 0
          %701 = vmatpush1.bf16.msra.mxu0 0
          %702 = vmatprep.mubr.bf16.mxu0 0
          %703 = vmatmul.mubr.bf16.gmra.mrb[0].mxu0 %v668
          %v704 = vpop.f32.mrb[0].mxu0
          %v705 = vadd.f32 0.0, %v704
          %v706 = vpop.f32.mrb[0].mxu0
          %v707 = vpop.f32.mrb[0].mxu0
          %v708 = vpop.f32.mrb[0].mxu0
          %709 = vdwg.mxu0
          %v710 = vsel %vm642, %v648, 0.0
          %711 = vadd.xlane.f32.xlu0 %v710
          %v712 = vpop.xlane.xlu0 %711
          %vm713 = vcmask 123904
          %v714 = vsel %vm713, %v705, 0.0
          %715 = vadd.xlane.f32.xlu0 %v714
          %v716 = vpop.xlane.xlu0 %715
          %v717 = vadd.f32 %v712, %v716
          %v718 = vmul.f32 %v717, 0.020833334
          %v719 = vsub.f32 %v648, %v718
          %v720 = vsub.f32 %v705, %v718
          %v721 = vmul.f32 %v719, %v719
          %v722 = vsel %vm642, %v721, 0.0
          %723 = vadd.xlane.f32.xlu0 %v722
          %v724 = vpop.xlane.xlu0 %723
          %v725 = vmul.f32 %v720, %v720
          %v726 = vsel %vm713, %v725, 0.0
          %727 = vadd.xlane.f32.xlu0 %v726
          %v728 = vpop.xlane.xlu0 %727
          %v729 = vadd.f32 %v724, %v728
          %v730 = vmul.f32 %v729, 0.020833334
          %v731 = vadd.f32 %v730, 1e-05
          %v732 = vrsqrt.pop %v731
          %v733 = vmul.f32 %v719, %v732
          %v734 = vld [vmem:[%s4] sm:$0x1]
          %v736 = vlaneseq
          %v737 = vshrl.u32 %v736, 7
          %v738 = vsub.s32 0, %v737
          %v739 = vrot.slane %v734, %v738
          %v741 = vmul.f32 %v733, %v739
          %v742 = vld [vmem:[%s6] sm:$0x1]
          %v744 = vlaneseq
          %v745 = vshrl.u32 %v744, 7
          %v746 = vsub.s32 0, %v745
          %v747 = vrot.slane %v742, %v746
          %v749 = vadd.f32 %v741, %v747
          %v750 = vmax.f32 %v749, 0.0
          %v751 = vmul.f32 %v720, %v732
          %v752 = vld [vmem:[%s5] sm:$0x1]
          %v754 = vlaneseq
          %v755 = vshrl.u32 %v754, 7
          %v756 = vsub.s32 0, %v755
          %v757 = vrot.slane %v752, %v756
          %v759 = vmul.f32 %v751, %v757
          %v760 = vld [vmem:[%s7] sm:$0x1]
          %v762 = vlaneseq
          %v763 = vshrl.u32 %v762, 7
          %v764 = vsub.s32 0, %v763
          %v765 = vrot.slane %v760, %v764
          %v767 = vadd.f32 %v759, %v765
          %v768 = vmax.f32 %v767, 0.0
          %v769 = vld [vmem:[%s8] sm:$0xff]
          %v770 = vld [vmem:[%s8 + $0x8] sm:$0xff]
          %v771 = vld [vmem:[%s8 + $0x10] sm:$0xff]
          %v772 = vld [vmem:[%s8 + $0x18] sm:$0xff]
          %v773 = vld [vmem:[%s9] sm:$0xff]
          %v774 = vld [vmem:[%s9 + $0x8] sm:$0xff]
          %vm775 = vcmask 130048
          %v777 = vsel %vm775, %v768, 0
          %779 = vmatprep.subr.mxu0 0.0
          %780 = vmatpush1.msra.mxu0 %v773
          %781 = vmatprep.subr.mxu0 0.0
          %782 = vmatpush1.msra.mxu0 %v774
          %783 = vmatprep.subr.mxu0 0.0
          %784 = vmatpush1.msra.mxu0 0.0
          %785 = vmatprep.subr.mxu0 0.0
          %786 = vmatpush1.msra.mxu0 0.0
          %787 = vmatprep.subr.mxu0 0.0
          %788 = vmatpush1.msra.mxu0 0.0
          %789 = vmatprep.subr.mxu0 0.0
          %790 = vmatpush1.msra.mxu0 0.0
          %791 = vmatprep.subr.mxu0 0.0
          %792 = vmatpush1.msra.mxu0 0.0
          %793 = vmatprep.subr.mxu0 0.0
          %794 = vmatpush1.msra.mxu0 0.0
          %795 = vmatprep.subr.mxu0 0.0
          %796 = vmatpush1.msra.mxu0 0.0
          %797 = vmatprep.subr.mxu0 0.0
          %798 = vmatpush1.msra.mxu0 0.0
          %799 = vmatprep.subr.mxu0 0.0
          %800 = vmatpush1.msra.mxu0 0.0
          %801 = vmatprep.subr.mxu0 0.0
          %802 = vmatpush1.msra.mxu0 0.0
          %803 = vmatprep.subr.mxu0 0.0
          %804 = vmatpush1.msra.mxu0 0.0
          %805 = vmatprep.subr.mxu0 0.0
          %806 = vmatpush1.msra.mxu0 0.0
          %807 = vmatprep.subr.mxu0 0.0
          %808 = vmatpush1.msra.mxu0 0.0
          %809 = vmatprep.subr.mxu0 0.0
          %810 = vmatpush1.msra.mxu0 0.0
          %811 = vmatprep.subr.mxu0 0.0
          %812 = vmatpush1.msra.mxu0 0.0
          %813 = vmatprep.subr.mxu0 0.0
          %814 = vmatpush1.msra.mxu0 0.0
          %815 = vmatprep.subr.mxu0 0.0
          %816 = vmatpush1.msra.mxu0 0.0
          %817 = vmatprep.subr.mxu0 0.0
          %818 = vmatpush1.msra.mxu0 0.0
          %819 = vmatprep.subr.mxu0 0.0
          %820 = vmatpush1.msra.mxu0 0.0
          %821 = vmatprep.subr.mxu0 0.0
          %822 = vmatpush1.msra.mxu0 0.0
          %823 = vmatprep.subr.mxu0 0.0
          %824 = vmatpush1.msra.mxu0 0.0
          %825 = vmatprep.subr.mxu0 0.0
          %826 = vmatpush1.msra.mxu0 0.0
          %827 = vmatprep.subr.mxu0 0.0
          %828 = vmatpush1.msra.mxu0 0.0
          %829 = vmatprep.subr.mxu0 0.0
          %830 = vmatpush1.msra.mxu0 0.0
          %831 = vmatprep.subr.mxu0 0.0
          %832 = vmatpush1.msra.mxu0 0.0
          %833 = vmatprep.subr.mxu0 0.0
          %834 = vmatpush1.msra.mxu0 0.0
          %835 = vmatprep.subr.mxu0 0.0
          %836 = vmatpush1.msra.mxu0 0.0
          %837 = vmatprep.subr.mxu0 0.0
          %838 = vmatpush1.msra.mxu0 0.0
          %839 = vmatprep.subr.mxu0 0.0
          %840 = vmatpush1.msra.mxu0 0.0
          %841 = vmatprep.subr.mxu0 0.0
          %842 = vmatpush1.msra.mxu0 0.0
          %843 = vmatprep.mubr.f32.mxu0 0.0
          %844 = vmatmul.mubr.f32.gmra.mrb[0].mxu0 %v777
          %v845 = vpop.f32.mrb[0].mxu0
          %v846 = vadd.f32 0.0, %v845
          %v847 = vpop.f32.mrb[0].mxu0
          %848 = vdwg.mxu0
          %v850 = vsel %vm666, %v750, 0
          %852 = vmatprep.subr.mxu0 0.0
          %853 = vmatpush1.msra.mxu0 %v769
          %854 = vmatprep.subr.mxu0 0.0
          %855 = vmatpush1.msra.mxu0 %v770
          %856 = vmatprep.subr.mxu0 0.0
          %857 = vmatpush1.msra.mxu0 %v771
          %858 = vmatprep.subr.mxu0 0.0
          %859 = vmatpush1.msra.mxu0 %v772
          %860 = vmatprep.subr.mxu0 0.0
          %861 = vmatpush1.msra.mxu0 0.0
          %862 = vmatprep.subr.mxu0 0.0
          %863 = vmatpush1.msra.mxu0 0.0
          %864 = vmatprep.subr.mxu0 0.0
          %865 = vmatpush1.msra.mxu0 0.0
          %866 = vmatprep.subr.mxu0 0.0
          %867 = vmatpush1.msra.mxu0 0.0
          %868 = vmatprep.subr.mxu0 0.0
          %869 = vmatpush1.msra.mxu0 0.0
          %870 = vmatprep.subr.mxu0 0.0
          %871 = vmatpush1.msra.mxu0 0.0
          %872 = vmatprep.subr.mxu0 0.0
          %873 = vmatpush1.msra.mxu0 0.0
          %874 = vmatprep.subr.mxu0 0.0
          %875 = vmatpush1.msra.mxu0 0.0
          %876 = vmatprep.subr.mxu0 0.0
          %877 = vmatpush1.msra.mxu0 0.0
          %878 = vmatprep.subr.mxu0 0.0
          %879 = vmatpush1.msra.mxu0 0.0
          %880 = vmatprep.subr.mxu0 0.0
          %881 = vmatpush1.msra.mxu0 0.0
          %882 = vmatprep.subr.mxu0 0.0
          %883 = vmatpush1.msra.mxu0 0.0
          %884 = vmatprep.subr.mxu0 0.0
          %885 = vmatpush1.msra.mxu0 0.0
          %886 = vmatprep.subr.mxu0 0.0
          %887 = vmatpush1.msra.mxu0 0.0
          %888 = vmatprep.subr.mxu0 0.0
          %889 = vmatpush1.msra.mxu0 0.0
          %890 = vmatprep.subr.mxu0 0.0
          %891 = vmatpush1.msra.mxu0 0.0
          %892 = vmatprep.subr.mxu0 0.0
          %893 = vmatpush1.msra.mxu0 0.0
          %894 = vmatprep.subr.mxu0 0.0
          %895 = vmatpush1.msra.mxu0 0.0
          %896 = vmatprep.subr.mxu0 0.0
          %897 = vmatpush1.msra.mxu0 0.0
          %898 = vmatprep.subr.mxu0 0.0
          %899 = vmatpush1.msra.mxu0 0.0
          %900 = vmatprep.subr.mxu0 0.0
          %901 = vmatpush1.msra.mxu0 0.0
          %902 = vmatprep.subr.mxu0 0.0
          %903 = vmatpush1.msra.mxu0 0.0
          %904 = vmatprep.subr.mxu0 0.0
          %905 = vmatpush1.msra.mxu0 0.0
          %906 = vmatprep.subr.mxu0 0.0
          %907 = vmatpush1.msra.mxu0 0.0
          %908 = vmatprep.subr.mxu0 0.0
          %909 = vmatpush1.msra.mxu0 0.0
          %910 = vmatprep.subr.mxu0 0.0
          %911 = vmatpush1.msra.mxu0 0.0
          %912 = vmatprep.subr.mxu0 0.0
          %913 = vmatpush1.msra.mxu0 0.0
          %914 = vmatprep.subr.mxu0 0.0
          %915 = vmatpush1.msra.mxu0 0.0
          %916 = vmatprep.mubr.f32.mxu0 0.0
          %917 = vmatmul.mubr.f32.gmra.mrb[0].mxu0 %v850
          %v918 = vpop.f32.mrb[0].mxu0
          %v919 = vadd.f32 %v846, %v918
          %v920 = vpop.f32.mrb[0].mxu0
          %921 = vdwg.mxu0
          %v922 = vld [vmem:[%s10] sm:$0x1]
          %v924 = vlaneseq
          %v925 = vshrl.u32 %v924, 7
          %v926 = vsub.s32 0, %v925
          %v927 = vrot.slane %v922, %v926
          %v929 = vadd.f32 %v919, %v927
          %930 = vst [vmem:[#allocation3] sm:$0x3] %v929
        $region72: #{tpu_custom_call.1} parent=63 // pred_fallthru
          _
        // Predicated region
        $region73: #{tpu_custom_call.1} parent=63 // pred_check
          %p931 = pneg %p301
        $region74: #{tpu_custom_call.1} parent=63 // pred_check_branch
          %933 = sbr.rel (%p931) target = $region76
        $region75: #{tpu_custom_call.1} parent=63 // pred_region
          %s935 = ssub.s32 32, 32
          %936 = vsyncadd [#allocation4], %s935
          %s937 = smul.addr %s27, 32
          %s938 = scalar_lea.hbm %s11, %s937
          %s940 = sshll.u32 [#allocation3], 4
          %s941 = int_to_ptr.vmem [resolvable:$true] %s940
          %943 = dma.vmem_to_hbm [thread:$0]  %s941, 32, %s938, [#allocation4]
        $region76: #{tpu_custom_call.1} parent=63 // pred_fallthru
          _
        // Predicated region
        $region77: #{tpu_custom_call.1} parent=63 // pred_check
          %p944 = pneg %p301
        $region78: #{tpu_custom_call.1} parent=63 // pred_check_branch
          %946 = sbr.rel (%p944) target = $region80
        $region79: #{tpu_custom_call.1} parent=63 // pred_region
          %947 = dma.done [#allocation4], 32
        $region80: #{tpu_custom_call.1} parent=63 // pred_fallthru
          _
      $region64: #{tpu_custom_call.1} parent=5 // pred_fallthru
        _
      %p948 = scmp.le.s32.totalorder 2, %s18
      // Predicated region
      $region81: #{tpu_custom_call.1} parent=5 // pred_check
        %p949 = pneg %p948
      $region82: #{tpu_custom_call.1} parent=5 // pred_check_branch
        %951 = sbr.rel (%p949) target = $region84
      $region83: #{tpu_custom_call.1} parent=5 // pred_region
        %s952 = ssub.s32 %s18, 2
      $region84: #{tpu_custom_call.1} parent=5 // pred_fallthru
        _
    $region6: #{tpu_custom_call.1} parent=1 // loop_footer
      %s22 = sadd.s32 1, %s18
    $region7: #{tpu_custom_call.1} parent=1 // loop_footer_branch
      %17 = sbr.rel target = $region3
    $region8: #{tpu_custom_call.1} parent=1 // loop_exit
      _
    %953 = vsyncpa [#allocation4], 1
    %s954 = scalar_lea.sflag [#allocation4], 1
    %955 = vsyncpa %s954, 1

</llo_original>
